<compile_context>
chip_gen: v7x
topology: tpu7x:2x2x1
jax: 0.10.0
libtpu: 0.0.40
codegen_flags: <defaults>
</compile_context>

<pallas_src>
import math

import jax
import jax.numpy as jnp
from jax.experimental import pallas as pl
from jax.experimental.pallas import tpu as pltpu

EMBED_DIM = 128        # must be even; multiple of 128 keeps stores lane-dense
PAD_IDX = 0


def _sinusoidal_pe_kernel(tok_ref, freq_ref, phase_ref, out_ref):
    # tok_ref:   (1, 1, S) int32
    # freq_ref:  (1, 1, E) float32  -- inv_freq tiled to full embed width
    # phase_ref: (1, 1, E) float32  -- 0 for the sin half, pi/2 for the cos half
    # out_ref:   (1, S, E) float32
    S = tok_ref.shape[-1]

    tok = tok_ref[0]                                         # (1, S)
    mask_f = (tok != PAD_IDX).astype(jnp.float32)            # (1, S)

    # Inclusive prefix sum along S: Hillis-Steele log-step scan using static
    # lane shifts (zero block + static slice, concatenated along lanes).
    # O(S log S) VPU work, no extra VMEM beyond a couple of (1, S) temps.
    counts = mask_f
    shift = 1
    while shift < S:
        shifted = jnp.concatenate(
            [jnp.zeros((1, shift), jnp.float32), counts[:, :S - shift]],
            axis=1)
        counts = counts + shifted
        shift *= 2

    # make_positions: cumsum(mask)*mask + pad_idx. Pad rows of the table are
    # all zeros, which the trailing mask multiply reproduces.
    pos = counts * mask_f + jnp.float32(PAD_IDX)             # (1, S)

    # Full-width angle; cos(x) == sin(x + pi/2), so one sin covers both halves
    # and the store is a single unmasked full-lane-width write.
    ang = pos[:, :, None] * freq_ref[...] + phase_ref[...]   # (1, S, E)
    out_ref[...] = jnp.sin(ang) * mask_f[:, :, None]


def sinusoidal_positional_embedding(tokens, embed_dim=EMBED_DIM):
    assert embed_dim % 2 == 0, "kernel implements even embed_dim only"
    tokens = tokens.astype(jnp.int32)
    B, S = tokens.shape
    half = embed_dim // 2

    # Frequencies: exp(arange(half) * -log(10000)/(half-1)); guard half == 1.
    denom = float(max(half - 1, 1))
    inv_freq = jnp.exp(jnp.arange(half, dtype=jnp.float32)
                       * (-math.log(10000.0) / denom))        # (half,)
    freq_full = jnp.tile(inv_freq, 2).reshape(1, 1, embed_dim)
    phase_full = jnp.concatenate(
        [jnp.zeros((half,), jnp.float32),
         jnp.full((half,), math.pi / 2, dtype=jnp.float32)]
    ).reshape(1, 1, embed_dim)

    tok3 = tokens.reshape(B, 1, S)   # free metadata reshape in the wrapper

    return pl.pallas_call(
        _sinusoidal_pe_kernel,
        out_shape=jax.ShapeDtypeStruct((B, S, embed_dim), jnp.float32),
        grid=(B,),
        in_specs=[
            pl.BlockSpec((1, 1, S), lambda b: (b, 0, 0)),
            pl.BlockSpec((1, 1, embed_dim), lambda b: (0, 0, 0)),
            pl.BlockSpec((1, 1, embed_dim), lambda b: (0, 0, 0)),
        ],
        out_specs=pl.BlockSpec((1, S, embed_dim), lambda b: (b, 0, 0)),
        compiler_params=pltpu.CompilerParams(
            dimension_semantics=("parallel",)),
    )(tok3, freq_full, phase_full)


def _reference(tokens, embed_dim=EMBED_DIM, pad_idx=PAD_IDX):
    """Pure-JAX replica of the PyTorch module (table build + gather)."""
    half = embed_dim // 2
    num_embed = pad_idx + 1 + tokens.shape[1]
    freq = jnp.exp(jnp.arange(half, dtype=jnp.float32)
                   * (-math.log(10000.0) / (half - 1)))
    ang = jnp.arange(num_embed, dtype=jnp.float32)[:, None] * freq[None, :]
    weights = jnp.concatenate([jnp.sin(ang), jnp.cos(ang)], axis=1)
    weights = weights.at[pad_idx, :].set(0.0)
    mask = (tokens != pad_idx).astype(jnp.int32)
    positions = jnp.cumsum(mask, axis=1) * mask + pad_idx
    B, S = tokens.shape
    return weights[positions.reshape(-1)].reshape(B, S, embed_dim)


if __name__ == "__main__":
    key = jax.random.PRNGKey(0)
    B, S = 2, 8
    tokens = jax.random.randint(key, (B, S), 0, 50, dtype=jnp.int32)
    # deterministically force some padding tokens
    tokens = tokens.at[0, -2:].set(PAD_IDX)
    tokens = tokens.at[1, -1:].set(PAD_IDX)

    out = sinusoidal_positional_embedding(tokens)
    jax.block_until_ready(out)

    ref = _reference(tokens)
    assert out.shape == (B, S, EMBED_DIM)
    assert out.dtype == jnp.float32
    assert jnp.allclose(out, ref, atol=1e-5, rtol=1e-5), "mismatch vs reference"
    print("KERNEL_OK")
</pallas_src>

<mosaic_0001>
module attributes {stable_mosaic.version = 11 : i64} {
  func.func @_sinusoidal_pe_kernel(%arg0: i32, %arg1: memref<1x1x8xi32, #tpu.memory_space<vmem>>, %arg2: memref<1x1x128xf32, #tpu.memory_space<vmem>>, %arg3: memref<1x1x128xf32, #tpu.memory_space<vmem>>, %arg4: memref<1x8x128xf32, #tpu.memory_space<vmem>>) attributes {dimension_semantics = [#tpu.dimension_semantics<parallel>], iteration_bounds = array<i64: 2>, scalar_prefetch = 0 : i64, scratch_operands = 0 : i64, tpu.core_type = #tpu.core_type<tc>, window_params = [{transform_indices = @transform_0, window_bounds = array<i64: 1, 1, 8>}, {pipeline_mode = #tpu.pipeline_mode<synchronous>, transform_indices = @transform_1, window_bounds = array<i64: 1, 1, 128>}, {pipeline_mode = #tpu.pipeline_mode<synchronous>, transform_indices = @transform_2, window_bounds = array<i64: 1, 1, 128>}, {transform_indices = @transform_3, window_bounds = array<i64: 1, 8, 128>}]} {
    %c0 = arith.constant 0 : index
    %c0_0 = arith.constant 0 : index
    %c0_1 = arith.constant 0 : index
    %0 = vector.load %arg1[%c0, %c0_0, %c0_1] : memref<1x1x8xi32, #tpu.memory_space<vmem>>, vector<1x1x8xi32>
    %1 = vector.shape_cast %0 : vector<1x1x8xi32> to vector<1x8xi32>
    %c0_i32 = arith.constant 0 : i32
    %2 = vector.broadcast %c0_i32 : i32 to vector<1x8xi32>
    %3 = arith.cmpi ne, %1, %2 : vector<1x8xi32>
    %4 = arith.extui %3 : vector<1x8xi1> to vector<1x8xi32>
    %5 = arith.sitofp %4 : vector<1x8xi32> to vector<1x8xf32>
    %cst = arith.constant 0.000000e+00 : f32
    %6 = vector.broadcast %cst : f32 to vector<1x1xf32>
    %7 = vector.extract_strided_slice %5 {offsets = [0, 0], sizes = [1, 7], strides = [1, 1]} : vector<1x8xf32> to vector<1x7xf32>
    %8 = tpu.concatenate %6, %7 in 1 : vector<1x1xf32>, vector<1x7xf32> -> vector<1x8xf32>
    %9 = arith.addf %5, %8 : vector<1x8xf32>
    %cst_2 = arith.constant 0.000000e+00 : f32
    %10 = vector.broadcast %cst_2 : f32 to vector<1x2xf32>
    %11 = vector.extract_strided_slice %9 {offsets = [0, 0], sizes = [1, 6], strides = [1, 1]} : vector<1x8xf32> to vector<1x6xf32>
    %12 = tpu.concatenate %10, %11 in 1 : vector<1x2xf32>, vector<1x6xf32> -> vector<1x8xf32>
    %13 = arith.addf %9, %12 : vector<1x8xf32>
    %cst_3 = arith.constant 0.000000e+00 : f32
    %14 = vector.broadcast %cst_3 : f32 to vector<1x4xf32>
    %15 = vector.extract_strided_slice %13 {offsets = [0, 0], sizes = [1, 4], strides = [1, 1]} : vector<1x8xf32> to vector<1x4xf32>
    %16 = tpu.concatenate %14, %15 in 1 : vector<1x4xf32>, vector<1x4xf32> -> vector<1x8xf32>
    %17 = arith.addf %13, %16 : vector<1x8xf32>
    %18 = arith.mulf %17, %5 : vector<1x8xf32>
    %cst_4 = arith.constant 0.000000e+00 : f32
    %19 = vector.broadcast %cst_4 : f32 to vector<1x8xf32>
    %20 = arith.addf %18, %19 : vector<1x8xf32>
    %21 = vector.shape_cast %20 : vector<1x8xf32> to vector<1x8x1xf32>
    %c0_5 = arith.constant 0 : index
    %c0_6 = arith.constant 0 : index
    %c0_7 = arith.constant 0 : index
    %22 = vector.load %arg2[%c0_5, %c0_6, %c0_7] : memref<1x1x128xf32, #tpu.memory_space<vmem>>, vector<1x1x128xf32>
    %23 = vector.broadcast %21 : vector<1x8x1xf32> to vector<1x8x128xf32>
    %24 = vector.broadcast %22 : vector<1x1x128xf32> to vector<1x8x128xf32>
    %25 = arith.mulf %23, %24 : vector<1x8x128xf32>
    %c0_8 = arith.constant 0 : index
    %c0_9 = arith.constant 0 : index
    %c0_10 = arith.constant 0 : index
    %26 = vector.load %arg3[%c0_8, %c0_9, %c0_10] : memref<1x1x128xf32, #tpu.memory_space<vmem>>, vector<1x1x128xf32>
    %27 = vector.broadcast %26 : vector<1x1x128xf32> to vector<1x8x128xf32>
    %28 = arith.addf %25, %27 : vector<1x8x128xf32>
    %29 = math.sin %28 : vector<1x8x128xf32>
    %30 = vector.shape_cast %5 : vector<1x8xf32> to vector<1x8x1xf32>
    %31 = vector.broadcast %30 : vector<1x8x1xf32> to vector<1x8x128xf32>
    %32 = arith.mulf %29, %31 : vector<1x8x128xf32>
    %c0_11 = arith.constant 0 : index
    %c0_12 = arith.constant 0 : index
    %c0_13 = arith.constant 0 : index
    %33 = vector.load %arg4[%c0_11, %c0_12, %c0_13] : memref<1x8x128xf32, #tpu.memory_space<vmem>>, vector<1x8x128xf32>
    tpu.vector_store %arg4[%c0_11, %c0_12, %c0_13], %32 {strides = array<i32>} : memref<1x8x128xf32, #tpu.memory_space<vmem>>, vector<1x8x128xf32>,
    return
  }
  func.func @transform_0(%arg0: i32) -> (i32, i32, i32) {
    %c0_i32 = arith.constant 0 : i32
    %c0_i32_0 = arith.constant 0 : i32
    %c0_i32_1 = arith.constant 0 : i32
    return %arg0, %c0_i32, %c0_i32_0 : i32, i32, i32
  }
  func.func @transform_1(%arg0: i32) -> (i32, i32, i32) {
    %c0_i32 = arith.constant 0 : i32
    %c0_i32_0 = arith.constant 0 : i32
    %c0_i32_1 = arith.constant 0 : i32
    %c0_i32_2 = arith.constant 0 : i32
    return %c0_i32, %c0_i32_0, %c0_i32_1 : i32, i32, i32
  }
  func.func @transform_2(%arg0: i32) -> (i32, i32, i32) {
    %c0_i32 = arith.constant 0 : i32
    %c0_i32_0 = arith.constant 0 : i32
    %c0_i32_1 = arith.constant 0 : i32
    %c0_i32_2 = arith.constant 0 : i32
    return %c0_i32, %c0_i32_0, %c0_i32_1 : i32, i32, i32
  }
  func.func @transform_3(%arg0: i32) -> (i32, i32, i32) {
    %c0_i32 = arith.constant 0 : i32
    %c0_i32_0 = arith.constant 0 : i32
    %c0_i32_1 = arith.constant 0 : i32
    return %arg0, %c0_i32, %c0_i32_0 : i32, i32, i32
  }
}

</mosaic_0001>

<llo_original>
// kernel: tpu_custom_call.1
$region0: #{tpu_custom_call.1}
  #allocation0 [shape = 'u32[]', space=smem, size = 0x4, offset = 0x4, fixed_abs, tag = 'smem constant byte address 0x4 - core index']
  #allocation1 [shape = 'u32[144,128]{1,0:T(1,128)}', space=vmem, size = 0x12000, scoped, tag = 'internal scratch']
  %s0 = inlined_call_operand.hbm [shape: s32[2,1,8], index: 0, kind: input, shape index: {}]
  %s1 = inlined_call_operand.vmem [shape: f32[1,1,128], index: 1, kind: input, shape index: {}]
  %s2 = inlined_call_operand.vmem [shape: f32[1,1,128], index: 2, kind: input, shape index: {}]
  %s3 = inlined_call_operand.hbm [shape: f32[2,8,128], index: 3, kind: output, shape index: {}]
  %s4 = sld [smem:[#allocation0]]
  $region49: #{tpu_custom_call.1} parent=0
    _
  %s6 = ssub.s32 1, %s4
  %s7 = scalar_select 0, %s6, %s4
  $region1: #{tpu_custom_call.1} parent=0
    #allocation2 [shape = 'u8[1024]{0}', space=vmem, size = 0x400, scoped, tag = 'input window, operand 0']
    #allocation3 [shape = 's32[2]{0}', space=sflag, size = 0x8, scoped, tag = 'scoped memory for tpu_custom_call.1']
    #allocation4 [shape = 's32[2]{0}', space=sflag, size = 0x8, scoped, tag = 'scoped memory for tpu_custom_call.1']
    #allocation5 [shape = 'u8[8192]{0}', space=vmem, size = 0x2000, scoped, tag = 'output window, operand 0']
    %8 = vsyncpa [#allocation3], 0
    %s9 = scalar_lea.sflag [#allocation3], 1
    %10 = vsyncpa %s9, 0
    %11 = vsyncpa [#allocation4], 0
    %s12 = scalar_lea.sflag [#allocation4], 1
    %13 = vsyncpa %s12, 0
    loop: start=0, step=1, limit=4
    $region2: #{tpu_custom_call.1} parent=1 // loop_pre_header
      _
    $region3: #{tpu_custom_call.1} parent=1 // loop_header
      %s15 = sphi 0, %s19
      %p16 = scmp.ge.s32.totalorder %s15, 4
      %s25 = sphi 0, %s27
      %s28 = sphi 0, %s25
      %s29 = sphi 0, %s28
      %s45 = sphi 0, %s29
      %s49 = sphi 0, %s49
      %s51 = sphi 0, %s49
      %s52 = sphi 0, %s51
      %s66 = sphi 0, %s52
      %s70 = sphi 0, %s70
      %s72 = sphi 0, %s70
      %s73 = sphi 0, %s72
      %s87 = sphi 0, %s73
      %s93 = sphi 0, %s95
      %s96 = sphi 0, %s93
      %s97 = sphi 0, %s96
      %s113 = sphi 0, %s97
    $region4: #{tpu_custom_call.1} parent=1 // loop_header_branch
      %18 = sbr.rel (%p16) target = $region8
    $region5: #{tpu_custom_call.1} parent=1 // loop_body
      %s20 = ssub.s32 %s15, 1
      %s21 = ssub.s32 %s15, 2
      %s22 = sadd.s32 %s15, 1
      %s23 = ssub.s32 %s15, %s22
      %p24 = scmp.eq.s32.totalorder %s23, 0
      %s26 = sadd.s32 %s25, 1
      %s27 = scalar_select %p24, %s25, %s26
      %p30 = pneg %p24
      %p31 = scmp.eq.s32.totalorder %s15, 1
      %p32 = por %p30, %p31
      %p33 = scmp.ne.s32.totalorder %s25, %s28
      %p34 = scmp.eq.s32.totalorder %s15, 0
      %p35 = por %p33, %p34
      %p36 = scmp.ne.s32.totalorder %s25, %s28
      %p37 = scmp.eq.s32.totalorder %s20, 1
      %p38 = por %p36, %p37
      %p39 = scmp.ne.s32.totalorder %s28, %s29
      %p40 = scmp.eq.s32.totalorder %s20, 0
      %p41 = por %p39, %p40
      %p42 = scmp.ne.s32.totalorder %s28, %s29
      %p43 = scmp.eq.s32.totalorder %s21, 1
      %p44 = por %p42, %p43
      %p46 = scmp.ne.s32.totalorder %s29, %s45
      %p47 = scmp.eq.s32.totalorder %s21, 0
      %p48 = por %p46, %p47
      %s50 = sadd.s32 %s49, 1
      %p53 = scmp.eq.s32.totalorder %s15, 1
      %p54 = scmp.ne.s32.totalorder %s49, %s51
      %p55 = scmp.eq.s32.totalorder %s15, 0
      %p56 = por %p54, %p55
      %p57 = scmp.ne.s32.totalorder %s49, %s51
      %p58 = scmp.eq.s32.totalorder %s20, 1
      %p59 = por %p57, %p58
      %p60 = scmp.ne.s32.totalorder %s51, %s52
      %p61 = scmp.eq.s32.totalorder %s20, 0
      %p62 = por %p60, %p61
      %p63 = scmp.ne.s32.totalorder %s51, %s52
      %p64 = scmp.eq.s32.totalorder %s21, 1
      %p65 = por %p63, %p64
      %p67 = scmp.ne.s32.totalorder %s52, %s66
      %p68 = scmp.eq.s32.totalorder %s21, 0
      %p69 = por %p67, %p68
      %s71 = sadd.s32 %s70, 1
      %p74 = scmp.eq.s32.totalorder %s15, 1
      %p75 = scmp.ne.s32.totalorder %s70, %s72
      %p76 = scmp.eq.s32.totalorder %s15, 0
      %p77 = por %p75, %p76
      %p78 = scmp.ne.s32.totalorder %s70, %s72
      %p79 = scmp.eq.s32.totalorder %s20, 1
      %p80 = por %p78, %p79
      %p81 = scmp.ne.s32.totalorder %s72, %s73
      %p82 = scmp.eq.s32.totalorder %s20, 0
      %p83 = por %p81, %p82
      %p84 = scmp.ne.s32.totalorder %s72, %s73
      %p85 = scmp.eq.s32.totalorder %s21, 1
      %p86 = por %p84, %p85
      %p88 = scmp.ne.s32.totalorder %s73, %s87
      %p89 = scmp.eq.s32.totalorder %s21, 0
      %p90 = por %p88, %p89
      %s91 = ssub.s32 %s15, %s22
      %p92 = scmp.eq.s32.totalorder %s91, 0
      %s94 = sadd.s32 %s93, 1
      %s95 = scalar_select %p92, %s93, %s94
      %p98 = pneg %p92
      %p99 = scmp.eq.s32.totalorder %s15, 1
      %p100 = por %p98, %p99
      %p101 = scmp.ne.s32.totalorder %s93, %s96
      %p102 = scmp.eq.s32.totalorder %s15, 0
      %p103 = por %p101, %p102
      %p104 = scmp.ne.s32.totalorder %s93, %s96
      %p105 = scmp.eq.s32.totalorder %s20, 1
      %p106 = por %p104, %p105
      %p107 = scmp.ne.s32.totalorder %s96, %s97
      %p108 = scmp.eq.s32.totalorder %s20, 0
      %p109 = por %p107, %p108
      %p110 = scmp.ne.s32.totalorder %s96, %s97
      %p111 = scmp.eq.s32.totalorder %s21, 1
      %p112 = por %p110, %p111
      %p114 = scmp.ne.s32.totalorder %s97, %s113
      %p115 = scmp.eq.s32.totalorder %s21, 0
      %p116 = por %p114, %p115
      %p117 = scmp.le.s32.totalorder 1, %s15
      %p118 = scmp.lt.s32.totalorder %s15, 3
      %p119 = pnand %p117, %p118
      %p120 = pneg %p119
      // Predicated region
      $region9: #{tpu_custom_call.1} parent=5 // pred_check
        _
      $region10: #{tpu_custom_call.1} parent=5 // pred_check_branch
        %122 = sbr.rel (%p119) target = $region12
      $region11: #{tpu_custom_call.1} parent=5 // pred_region
        %s123 = ssub.s32 %s15, 1
        // Predicated region
        $region13: #{tpu_custom_call.1} parent=11 // pred_check
          %p124 = pneg %p62
        $region14: #{tpu_custom_call.1} parent=11 // pred_check_branch
          %126 = sbr.rel (%p124) target = $region16
        $region15: #{tpu_custom_call.1} parent=11 // pred_region
          _
        $region16: #{tpu_custom_call.1} parent=11 // pred_fallthru
          _
        // Predicated region
        $region17: #{tpu_custom_call.1} parent=11 // pred_check
          %p127 = pneg %p83
        $region18: #{tpu_custom_call.1} parent=11 // pred_check_branch
          %129 = sbr.rel (%p127) target = $region20
        $region19: #{tpu_custom_call.1} parent=11 // pred_region
          _
        $region20: #{tpu_custom_call.1} parent=11 // pred_fallthru
          _
      $region12: #{tpu_custom_call.1} parent=5 // pred_fallthru
        _
      %p130 = scmp.lt.s32.totalorder %s15, 2
      // Predicated region
      $region21: #{tpu_custom_call.1} parent=5 // pred_check
        %p131 = pneg %p130
      $region22: #{tpu_custom_call.1} parent=5 // pred_check_branch
        %133 = sbr.rel (%p131) target = $region24
      $region23: #{tpu_custom_call.1} parent=5 // pred_region
        // Predicated region
        $region25: #{tpu_custom_call.1} parent=23 // pred_check
          %p134 = pneg %p35
        $region26: #{tpu_custom_call.1} parent=23 // pred_check_branch
          %136 = sbr.rel (%p134) target = $region28
        $region27: #{tpu_custom_call.1} parent=23 // pred_region
          %s137 = sand.u32 %s25, 1
          %s138 = scalar_lea.sflag [#allocation3], %s137
          %s139 = sand.u32 %s25, 1
          %s140 = scalar_lea.vmem [#allocation2], %s139
          %s142 = ssub.s32 16, 16
          %143 = vsyncadd %s138, %s142
          %s144 = smul.addr %s15, 16
          %s145 = scalar_lea.hbm %s0, %s144
          %s147 = sshll.u32 %s140, 4
          %s148 = int_to_ptr.vmem [resolvable:$true] %s147
          %150 = dma.hbm_to_vmem [thread:$0]  %s145, 16, %s148, %s138
        $region28: #{tpu_custom_call.1} parent=23 // pred_fallthru
          _
      $region24: #{tpu_custom_call.1} parent=5 // pred_fallthru
        _
      %p151 = scmp.le.s32.totalorder 1, %s15
      %p152 = scmp.lt.s32.totalorder %s15, 3
      %p153 = pnand %p151, %p152
      %p154 = pneg %p153
      // Predicated region
      $region29: #{tpu_custom_call.1} parent=5 // pred_check
        _
      $region30: #{tpu_custom_call.1} parent=5 // pred_check_branch
        %156 = sbr.rel (%p153) target = $region32
      $region31: #{tpu_custom_call.1} parent=5 // pred_region
        %s157 = ssub.s32 %s15, 1
        %s158 = sand.u32 %s28, 1
        %s159 = scalar_lea.sflag [#allocation3], %s158
        %s160 = sand.u32 %s28, 1
        %s161 = scalar_lea.vmem [#allocation2], %s160
        // Predicated region
        $region33: #{tpu_custom_call.1} parent=31 // pred_check
          %p162 = pneg %p41
        $region34: #{tpu_custom_call.1} parent=31 // pred_check_branch
          %164 = sbr.rel (%p162) target = $region36
        $region35: #{tpu_custom_call.1} parent=31 // pred_region
          %165 = dma.done %s159, 16
        $region36: #{tpu_custom_call.1} parent=31 // pred_fallthru
          _
        %s166 = sand.u32 %s28, 1
        %s167 = scalar_lea.sflag [#allocation3], %s166
        %s168 = sand.u32 %s28, 1
        %s169 = scalar_lea.vmem [#allocation2], %s168
        %p170 = pneg %p41
        %p171 = pneg %p38
        %p172 = pneg %p62
        %p173 = pneg %p59
        %p174 = pneg %p83
        %p175 = pneg %p80
        %p176 = pneg %p109
        %p177 = pneg %p106
        %s178 = sand.u32 %s96, 1
        %s179 = scalar_lea.sflag [#allocation4], %s178
        %s180 = sand.u32 %s96, 1
        %s181 = smul.addr %s180, 8
        %s182 = scalar_lea.vmem [#allocation5], %s181
        %v183 = vld [vmem:[%s161] sm:$0x1]
        %vm184 = vcmp.ne.s32.totalorder %v183, 0
        %v185 = vsel %vm184, 1, 0
        %v186 = vcvt.s32.f32 %v185
        %v188 = vlaneseq
        %v189 = vshrl.u32 %v188, 7
        %v190 = vsub.s32 0, %v189
        %v191 = vrot.slane %v186, %v190
        %192 = vrot.lane.b32.xlu0 %v191, 1
        %v193 = vpop.permute.xlu0 %192
        %vm195 = vcmask 7168
        %v196 = vsel %vm195, 0.0, %v193
        %v197 = vadd.f32 %v186, %v196
        %v199 = vlaneseq
        %v200 = vshrl.u32 %v199, 7
        %v201 = vsub.s32 0, %v200
        %v202 = vrot.slane %v197, %v201
        %203 = vrot.lane.b32.xlu0 %v202, 2
        %v204 = vpop.permute.xlu0 %203
        %vm206 = vcmask 15360
        %v207 = vsel %vm206, 0.0, %v204
        %v208 = vadd.f32 %v197, %v207
        %v210 = vlaneseq
        %v211 = vshrl.u32 %v210, 7
        %v212 = vsub.s32 0, %v211
        %v213 = vrot.slane %v208, %v212
        %214 = vrot.lane.b32.xlu0 %v213, 4
        %v215 = vpop.permute.xlu0 %214
        %vm217 = vcmask 31744
        %v218 = vsel %vm217, 0.0, %v215
        %v219 = vadd.f32 %v208, %v218
        %v220 = vmul.f32 %v219, %v186
        %v221 = vadd.f32 %v220, 0.0
        %v222 = vlaneseq
        %v223 = vshrl.u32 %v222, 7
        %v224 = vsub.s32 0, %v223
        %v225 = vrot.slane %v221, %v224
        %227 = vbcast.lane.b32.xlu0 %v225, 256
        %v228 = vpop.permute.xlu0 %227
        %v229 = vld [vmem:[%s1] sm:$0x1]
        %v231 = vlaneseq
        %v232 = vshrl.u32 %v231, 7
        %v233 = vsub.s32 0, %v232
        %v234 = vrot.slane %v229, %v233
        %v236 = vmul.f32 %v228, %v234
        %v237 = vld [vmem:[%s2] sm:$0x1]
        %v239 = vlaneseq
        %v240 = vshrl.u32 %v239, 7
        %v241 = vsub.s32 0, %v240
        %v242 = vrot.slane %v237, %v241
        %v244 = vadd.f32 %v236, %v242
        %v245 = vand.u32 2147483647, %v244
        %vm246 = vcmp.le.f32.partialorder %v245, 0.7853982
        %vm247 = vcmp.lt.s32.totalorder %v244, 0
        %v248 = vand.u32 %v244, 2139095040
        %v249 = vshrl.u32 %v248, 23
        %v250 = vsub.s32 %v249, 127
        %v251 = vand.u32 2147483647, %v244
        %v252 = vand.u32 %v251, 8388607
        %v253 = vor.u32 %v252, 8388608
        %v254 = vsub.s32 0, %v253
        %v255 = vadd.s32 %v250, 1
        %vm256 = vcmp.gt.s32.totalorder %v255, 0
        %v257 = vsel %vm256, %v255, 0
        %v258 = vshrl.u32 %v257, 5
        %v259 = vand.u32 %v257, 31
        %v260 = vsub.s32 32, %v259
        %v261 = vshrl.u32 683565275, %v260
        %v262 = vshll.u32 683565275, %v259
        %v263 = vshrl.u32 2475754826, %v260
        %v264 = vor.u32 %v262, %v263
        %v265 = vshll.u32 2475754826, %v259
        %v266 = vshrl.u32 2131351028, %v260
        %v267 = vor.u32 %v265, %v266
        %v268 = vshll.u32 2131351028, %v259
        %v269 = vshrl.u32 2102212464, %v260
        %v270 = vor.u32 %v268, %v269
        %v271 = vshll.u32 2102212464, %v259
        %v272 = vshrl.u32 920167782, %v260
        %v273 = vor.u32 %v271, %v272
        %v274 = vshll.u32 920167782, %v259
        %v275 = vshrl.u32 1326507024, %v260
        %v276 = vor.u32 %v274, %v275
        %vm277 = vcmp.lt.s32.totalorder %v258, 1
        %vm278 = vcmp.lt.s32.totalorder %v258, 2
        %vm279 = vcmp.lt.s32.totalorder %v258, 3
        %vm280 = vcmp.lt.s32.totalorder %v258, 4
        %v281 = vsel %vm277, %v261, %v264
        %v282 = vsel %vm280, %v270, 2102212464
        %v283 = vsel %vm279, %v267, %v282
        %v284 = vsel %vm278, %v281, %v283
        %v285 = vsel %vm277, %v264, %v267
        %v286 = vsel %vm280, %v273, 920167782
        %v287 = vsel %vm279, %v270, %v286
        %v288 = vsel %vm278, %v285, %v287
        %v289 = vsel %vm277, %v267, %v270
        %v290 = vsel %vm280, %v276, 1326507024
        %v291 = vsel %vm279, %v273, %v290
        %v292 = vsel %vm278, %v289, %v291
        %v293 = vshll.u32 %v253, 8
        %v294 = vmul.u32.u64.compose %v293, %v292
        %v295 = vextract.low.u32 %v294
        %v296 = vextract.high.u32 %v294
        %v297 = vmul.u32.u64.compose %v293, %v288
        %v298 = vextract.low.u32 %v297
        %v299 = vextract.high.u32 %v297
        %v300 = vmul.u32 %v293, %v284
        %v301 = vadd.s32 %v296, %v298
        %vm302 = vc.u32 %v296, %v298
        %v303 = vadd.s32 %v299, 1
        %v304 = vsel %vm302, %v303, %v299
        %v305 = vadd.s32 %v300, %v304
        %v306 = vadd.s32 %v305, 536870912
        %v307 = vshrl.u32 %v306, 30
        %v308 = vshll.u32 %v307, 30
        %v309 = vsub.s32 %v305, %v308
        %vm310 = vcmp.lt.s32.totalorder %v309, 0
        %v311 = vsub.s32 0, %v309
        %v312 = vsel %vm310, %v311, %v309
        %v313 = vclz %v312
        %v314 = vsub.s32 %v313, 2
        %vm315 = vcmp.gt.s32.totalorder 0, %v314
        %v316 = vsel %vm315, 0, %v314
        %v317 = vsub.s32 32, %v316
        %v318 = vshll.u32 %v309, %v316
        %v319 = vshrl.u32 %v301, %v317
        %v320 = vor.u32 %v318, %v319
        %v321 = vsub.s32 4294967266, %v316
        %v322 = vadd.s32 %v321, 127
        %v323 = vshll.u32 %v322, 23
        %v324 = vor.u32 4788187, %v323
        %v325 = vand.u32 2147483647, %v324
        %v327 = vcvt.s32.f32 %v320
        %v328 = vmul.f32 %v327, %v325
        %v329 = vxor.u32 %v328, 2147483648
        %v330 = vsel %vm247, %v329, %v328
        %v331 = vsub.s32 4, %v307
        %v332 = vsel %vm247, %v331, %v307
        %v333 = vsel %vm246, %v244, %v330
        %v334 = vsel %vm246, 0, %v332
        %v335 = vcosq.f32.pop %v333
        %v336 = vsinq.f32.pop %v333
        %vm337 = vweird.f32 %v244
        %v338 = vadd.s32 %v334, 3
        %v339 = vand.u32 %v338, 3
        %vm340 = vcmp.lt.s32.totalorder %v339, 2
        %vm341 = vcmp.eq.s32.totalorder %v339, 0
        %v342 = vxor.u32 %v336, 2147483648
        %v343 = vsel %vm341, %v335, %v342
        %vm344 = vcmp.eq.s32.totalorder %v339, 2
        %v345 = vxor.u32 %v335, 2147483648
        %v346 = vsel %vm344, %v345, %v336
        %v347 = vsel %vm340, %v343, %v346
        %v348 = vsel %vm337, nan, %v347
        %v349 = vlaneseq
        %v350 = vshrl.u32 %v349, 7
        %v351 = vsub.s32 0, %v350
        %v352 = vrot.slane %v186, %v351
        %354 = vbcast.lane.b32.xlu0 %v352, 256
        %v355 = vpop.permute.xlu0 %354
        %v356 = vmul.f32 %v348, %v355
        %357 = vst [vmem:[%s182] sm:$0xff] %v356
        %s358 = sand.u32 %s96, 1
        %s359 = scalar_lea.sflag [#allocation4], %s358
        %s360 = sand.u32 %s96, 1
        %s361 = smul.addr %s360, 8
        %s362 = scalar_lea.vmem [#allocation5], %s361
        // Predicated region
        $region37: #{tpu_custom_call.1} parent=31 // pred_check
          %p363 = pneg %p106
        $region38: #{tpu_custom_call.1} parent=31 // pred_check_branch
          %365 = sbr.rel (%p363) target = $region40
        $region39: #{tpu_custom_call.1} parent=31 // pred_region
          %s367 = ssub.s32 128, 128
          %368 = vsyncadd %s359, %s367
          %s369 = smul.addr %s20, 128
          %s370 = scalar_lea.hbm %s3, %s369
          %s372 = sshll.u32 %s362, 4
          %s373 = int_to_ptr.vmem [resolvable:$true] %s372
          %375 = dma.vmem_to_hbm [thread:$0]  %s373, 128, %s370, %s359
        $region40: #{tpu_custom_call.1} parent=31 // pred_fallthru
          _
      $region32: #{tpu_custom_call.1} parent=5 // pred_fallthru
        _
      %p376 = scmp.le.s32.totalorder 2, %s15
      // Predicated region
      $region41: #{tpu_custom_call.1} parent=5 // pred_check
        %p377 = pneg %p376
      $region42: #{tpu_custom_call.1} parent=5 // pred_check_branch
        %379 = sbr.rel (%p377) target = $region44
      $region43: #{tpu_custom_call.1} parent=5 // pred_region
        %s380 = ssub.s32 %s15, 2
        // Predicated region
        $region45: #{tpu_custom_call.1} parent=43 // pred_check
          %p381 = pneg %p112
        $region46: #{tpu_custom_call.1} parent=43 // pred_check_branch
          %383 = sbr.rel (%p381) target = $region48
        $region47: #{tpu_custom_call.1} parent=43 // pred_region
          %s384 = sand.u32 %s97, 1
          %s385 = scalar_lea.sflag [#allocation4], %s384
          %s386 = sand.u32 %s97, 1
          %s387 = smul.addr %s386, 8
          %s388 = scalar_lea.vmem [#allocation5], %s387
          %389 = dma.done %s385, 128
        $region48: #{tpu_custom_call.1} parent=43 // pred_fallthru
          _
      $region44: #{tpu_custom_call.1} parent=5 // pred_fallthru
        _
    $region6: #{tpu_custom_call.1} parent=1 // loop_footer
      %s19 = sadd.s32 1, %s15
    $region7: #{tpu_custom_call.1} parent=1 // loop_footer_branch
      %14 = sbr.rel target = $region3
    $region8: #{tpu_custom_call.1} parent=1 // loop_exit
      _
    %390 = vsyncpa [#allocation3], 1
    %s391 = scalar_lea.sflag [#allocation3], 1
    %392 = vsyncpa %s391, 1
    %393 = vsyncpa [#allocation4], 1
    %s394 = scalar_lea.sflag [#allocation4], 1
    %395 = vsyncpa %s394, 1

</llo_original>
